<compile_context>
chip_gen: v7x
topology: tpu7x:2x2x1
jax: 0.10.0
libtpu: 0.0.40
codegen_flags: <defaults>
</compile_context>

<pallas_src>
import jax
import jax.numpy as jnp
from jax import lax
from jax.experimental import pallas as pl
from jax.experimental.pallas import tpu as pltpu

_EPS = 1e-12          # added to squared norms (matches ATen cosine_embedding_loss)
_LANE = 128
_NCORES = 2           # leading "parallel" grid axis (2 TCs on v7x; serial elsewhere)
_ROWS_PER_BLOCK = 32768   # ~512-768 KB HBM traffic / grid step; ~8 MB VMEM total


def _round_up(x, m):
    return (x + m - 1) // m * m


def _make_kernel(C, R, r_blk, nblk_per_core, weighted):
    """Builds the row-streaming kernel. Blocks are (C, r_blk) / (1, r_blk)."""

    def kernel(*refs):
        if weighted:
            p_ref, t_ref, w_ref, out_ref = refs
        else:
            p_ref, t_ref, out_ref = refs

        c_id = pl.program_id(0)   # parallel (core) axis
        j = pl.program_id(1)      # arbitrary (reduction) axis

        @pl.when(j == 0)
        def _():
            out_ref[...] = jnp.zeros_like(out_ref)

        p = p_ref[...].astype(jnp.float32)   # (C, r_blk)
        t = t_ref[...].astype(jnp.float32)   # (C, r_blk)

        # Unrolled over the tiny static coord axis: pure lane-dense VPU work.
        dot = p[0:1, :] * t[0:1, :]
        pp = p[0:1, :] * p[0:1, :]
        tt = t[0:1, :] * t[0:1, :]
        for c in range(1, C):
            dot = dot + p[c:c + 1, :] * t[c:c + 1, :]
            pp = pp + p[c:c + 1, :] * p[c:c + 1, :]
            tt = tt + t[c:c + 1, :] * t[c:c + 1, :]

        inv = lax.rsqrt(pp + _EPS) * lax.rsqrt(tt + _EPS)   # EUP slot
        loss = 1.0 - dot * inv                              # (1, r_blk)

        if weighted:
            # padded rows carry weight 0, so no explicit mask needed
            loss = loss * w_ref[...].astype(jnp.float32)
        else:
            # mask padded rows (global row index >= R)
            base = (c_id * nblk_per_core + j) * r_blk
            col = base + lax.broadcasted_iota(jnp.int32, (1, r_blk), 1)
            loss = jnp.where(col < R, loss, 0.0)

        out_ref[...] += loss

    return kernel


def pts_dir_cos_loss(pred, target, weight=None, avg_factor=None,
                     reduction="mean", loss_weight=1.0):
    """pred/target: (num_samples, num_dir, num_coords); weight: (num_samples, num_dir)."""
    if target.size == 0:
        # torch path: return pred.sum() * 0
        return (jnp.sum(pred) * 0.0).astype(jnp.float32)
    if avg_factor is None:
        raise ValueError("avg_factor should not be none for PtsDirCosLoss")
    if reduction != "mean":
        # TODO(synk): only the 'mean' reduction path (module default) is implemented.
        raise NotImplementedError("only reduction='mean' is supported")

    S, D, C = pred.shape
    R = S * D
    weighted = weight is not None

    # Rows -> lane axis (lane-dense): (C, R). One XLA transpose; the kernel
    # then streams at HBM roofline with big lane-dense blocks.
    p2 = jnp.transpose(pred.reshape(R, C))
    t2 = jnp.transpose(target.reshape(R, C))

    r_blk = min(_ROWS_PER_BLOCK, _round_up(pl.cdiv(R, _NCORES), _LANE))
    nblk_per_core = pl.cdiv(R, _NCORES * r_blk)
    r_pad = _NCORES * nblk_per_core * r_blk

    if r_pad != R:
        p2 = jnp.pad(p2, ((0, 0), (0, r_pad - R)))
        t2 = jnp.pad(t2, ((0, 0), (0, r_pad - R)))

    operands = [p2, t2]
    in_specs = [
        pl.BlockSpec((C, r_blk), lambda c, j: (0, c * nblk_per_core + j)),
        pl.BlockSpec((C, r_blk), lambda c, j: (0, c * nblk_per_core + j)),
    ]
    if weighted:
        w2 = weight.reshape(1, R).astype(jnp.float32)
        if r_pad != R:
            w2 = jnp.pad(w2, ((0, 0), (0, r_pad - R)))  # zero weight kills padded rows
        operands.append(w2)
        in_specs.append(
            pl.BlockSpec((1, r_blk), lambda c, j: (0, c * nblk_per_core + j)))

    kernel = _make_kernel(C, R, r_blk, nblk_per_core, weighted)

    # Per-lane partial sums; each core owns its own lane slab of the output
    # and accumulates across the trailing "arbitrary" axis.
    partial = pl.pallas_call(
        kernel,
        out_shape=jax.ShapeDtypeStruct((1, _NCORES * r_blk), jnp.float32),
        grid=(_NCORES, nblk_per_core),
        in_specs=in_specs,
        out_specs=pl.BlockSpec((1, r_blk), lambda c, j: (0, c)),
        compiler_params=pltpu.CompilerParams(
            dimension_semantics=("parallel", "arbitrary")),
    )(*operands)

    total = jnp.sum(partial)   # tiny final reduce (NCORES * r_blk f32)
    return (loss_weight * total / avg_factor).astype(jnp.float32)


class PtsDirCosLoss:
    """JAX/Pallas equivalent of the PyTorch PtsDirCosLoss module (no parameters)."""

    def __init__(self, reduction="mean", loss_weight=1.0):
        self.reduction = reduction
        self.loss_weight = loss_weight

    def __call__(self, pred, target, weight=None, avg_factor=None,
                 reduction_override=None):
        assert reduction_override in (None, "none", "mean", "sum")
        reduction = reduction_override if reduction_override else self.reduction
        return pts_dir_cos_loss(pred, target, weight=weight,
                                avg_factor=avg_factor, reduction=reduction,
                                loss_weight=self.loss_weight)


def _reference(pred, target, weight, avg_factor, loss_weight=1.0):
    """Plain-JAX reference mirroring ATen cosine_embedding_loss semantics."""
    p = pred.astype(jnp.float32)
    t = target.astype(jnp.float32)
    dot = jnp.sum(p * t, axis=-1)
    pp = jnp.sum(p * p, axis=-1) + _EPS
    tt = jnp.sum(t * t, axis=-1) + _EPS
    cos = dot / jnp.sqrt(pp * tt)
    loss = 1.0 - cos
    if weight is not None:
        loss = loss * weight
    return loss_weight * jnp.sum(loss) / avg_factor


if __name__ == "__main__":
    key = jax.random.PRNGKey(0)
    k1, k2, k3 = jax.random.split(key, 3)

    # R = 7*20 = 140 rows: deliberately not a multiple of 128 to exercise the
    # padding / masking path; num_coords = 2 as in the map-direction use case.
    num_samples, num_dir, num_coords = 7, 20, 2
    pred = jax.random.normal(k1, (num_samples, num_dir, num_coords), jnp.float32)
    target = jax.random.normal(k2, (num_samples, num_dir, num_coords), jnp.float32)
    weight = jax.random.uniform(k3, (num_samples, num_dir), jnp.float32)
    avg_factor = float(jnp.sum(weight))

    loss_mod = PtsDirCosLoss(reduction="mean", loss_weight=1.0)

    # weighted path
    out_w = jax.block_until_ready(
        loss_mod(pred, target, weight=weight, avg_factor=avg_factor))
    ref_w = _reference(pred, target, weight, avg_factor)
    assert jnp.allclose(out_w, ref_w, rtol=1e-5, atol=1e-6), (out_w, ref_w)

    # no-weight path (dedicated kernel variant, iota mask for padded rows)
    nw_avg = float(num_samples * num_dir)
    out_nw = jax.block_until_ready(
        loss_mod(pred, target, weight=None, avg_factor=nw_avg))
    ref_nw = _reference(pred, target, None, nw_avg)
    assert jnp.allclose(out_nw, ref_nw, rtol=1e-5, atol=1e-6), (out_nw, ref_nw)

    print("KERNEL_OK")
</pallas_src>

<mosaic_0001>
module attributes {stable_mosaic.version = 11 : i64} {
  func.func @kernel(%arg0: i32, %arg1: i32, %arg2: memref<2x128xf32, #tpu.memory_space<vmem>>, %arg3: memref<2x128xf32, #tpu.memory_space<vmem>>, %arg4: memref<1x128xf32, #tpu.memory_space<vmem>>, %arg5: memref<1x128xf32, #tpu.memory_space<vmem>>) attributes {dimension_semantics = [#tpu.dimension_semantics<parallel>, #tpu.dimension_semantics<arbitrary>], iteration_bounds = array<i64: 2, 1>, scalar_prefetch = 0 : i64, scratch_operands = 0 : i64, tpu.core_type = #tpu.core_type<tc>, window_params = [{transform_indices = @transform_0, window_bounds = array<i64: 2, 128>}, {transform_indices = @transform_1, window_bounds = array<i64: 2, 128>}, {transform_indices = @transform_2, window_bounds = array<i64: 1, 128>}, {transform_indices = @transform_3, window_bounds = array<i64: 1, 128>}]} {
    %c0_i32 = arith.constant 0 : i32
    %0 = arith.cmpi eq, %arg1, %c0_i32 : i32
    %1 = arith.extui %0 : i1 to i32
    %c0_i32_0 = arith.constant 0 : i32
    %2 = arith.cmpi ne, %1, %c0_i32_0 : i32
    scf.if %2 {
      %cst_12 = arith.constant 0.000000e+00 : f32
      %41 = vector.broadcast %cst_12 : f32 to vector<1x128xf32>
      %c0_13 = arith.constant 0 : index
      %c0_14 = arith.constant 0 : index
      %42 = vector.load %arg5[%c0_13, %c0_14] : memref<1x128xf32, #tpu.memory_space<vmem>>, vector<1x128xf32>
      tpu.vector_store %arg5[%c0_13, %c0_14], %41 {strides = array<i32>} : memref<1x128xf32, #tpu.memory_space<vmem>>, vector<1x128xf32>,
    } else {
    }
    %c0 = arith.constant 0 : index
    %c0_1 = arith.constant 0 : index
    %3 = vector.load %arg2[%c0, %c0_1] : memref<2x128xf32, #tpu.memory_space<vmem>>, vector<2x128xf32>
    %c0_2 = arith.constant 0 : index
    %c0_3 = arith.constant 0 : index
    %4 = vector.load %arg3[%c0_2, %c0_3] : memref<2x128xf32, #tpu.memory_space<vmem>>, vector<2x128xf32>
    %5 = vector.extract_strided_slice %3 {offsets = [0, 0], sizes = [1, 128], strides = [1, 1]} : vector<2x128xf32> to vector<1x128xf32>
    %6 = vector.extract_strided_slice %4 {offsets = [0, 0], sizes = [1, 128], strides = [1, 1]} : vector<2x128xf32> to vector<1x128xf32>
    %7 = arith.mulf %5, %6 : vector<1x128xf32>
    %8 = vector.extract_strided_slice %3 {offsets = [0, 0], sizes = [1, 128], strides = [1, 1]} : vector<2x128xf32> to vector<1x128xf32>
    %9 = vector.extract_strided_slice %3 {offsets = [0, 0], sizes = [1, 128], strides = [1, 1]} : vector<2x128xf32> to vector<1x128xf32>
    %10 = arith.mulf %8, %9 : vector<1x128xf32>
    %11 = vector.extract_strided_slice %4 {offsets = [0, 0], sizes = [1, 128], strides = [1, 1]} : vector<2x128xf32> to vector<1x128xf32>
    %12 = vector.extract_strided_slice %4 {offsets = [0, 0], sizes = [1, 128], strides = [1, 1]} : vector<2x128xf32> to vector<1x128xf32>
    %13 = arith.mulf %11, %12 : vector<1x128xf32>
    %14 = vector.extract_strided_slice %3 {offsets = [1, 0], sizes = [1, 128], strides = [1, 1]} : vector<2x128xf32> to vector<1x128xf32>
    %15 = vector.extract_strided_slice %4 {offsets = [1, 0], sizes = [1, 128], strides = [1, 1]} : vector<2x128xf32> to vector<1x128xf32>
    %16 = arith.mulf %14, %15 : vector<1x128xf32>
    %17 = arith.addf %7, %16 : vector<1x128xf32>
    %18 = vector.extract_strided_slice %3 {offsets = [1, 0], sizes = [1, 128], strides = [1, 1]} : vector<2x128xf32> to vector<1x128xf32>
    %19 = vector.extract_strided_slice %3 {offsets = [1, 0], sizes = [1, 128], strides = [1, 1]} : vector<2x128xf32> to vector<1x128xf32>
    %20 = arith.mulf %18, %19 : vector<1x128xf32>
    %21 = arith.addf %10, %20 : vector<1x128xf32>
    %22 = vector.extract_strided_slice %4 {offsets = [1, 0], sizes = [1, 128], strides = [1, 1]} : vector<2x128xf32> to vector<1x128xf32>
    %23 = vector.extract_strided_slice %4 {offsets = [1, 0], sizes = [1, 128], strides = [1, 1]} : vector<2x128xf32> to vector<1x128xf32>
    %24 = arith.mulf %22, %23 : vector<1x128xf32>
    %25 = arith.addf %13, %24 : vector<1x128xf32>
    %cst = arith.constant 9.99999996E-13 : f32
    %26 = vector.broadcast %cst : f32 to vector<1x128xf32>
    %27 = arith.addf %21, %26 : vector<1x128xf32>
    %28 = math.rsqrt %27 : vector<1x128xf32>
    %cst_4 = arith.constant 9.99999996E-13 : f32
    %29 = vector.broadcast %cst_4 : f32 to vector<1x128xf32>
    %30 = arith.addf %25, %29 : vector<1x128xf32>
    %31 = math.rsqrt %30 : vector<1x128xf32>
    %32 = arith.mulf %28, %31 : vector<1x128xf32>
    %33 = arith.mulf %17, %32 : vector<1x128xf32>
    %cst_5 = arith.constant 1.000000e+00 : f32
    %34 = vector.broadcast %cst_5 : f32 to vector<1x128xf32>
    %35 = arith.subf %34, %33 : vector<1x128xf32>
    %c0_6 = arith.constant 0 : index
    %c0_7 = arith.constant 0 : index
    %36 = vector.load %arg4[%c0_6, %c0_7] : memref<1x128xf32, #tpu.memory_space<vmem>>, vector<1x128xf32>
    %37 = arith.mulf %35, %36 : vector<1x128xf32>
    %c0_8 = arith.constant 0 : index
    %c0_9 = arith.constant 0 : index
    %38 = vector.load %arg5[%c0_8, %c0_9] : memref<1x128xf32, #tpu.memory_space<vmem>>, vector<1x128xf32>
    %39 = arith.addf %38, %37 : vector<1x128xf32>
    %c0_10 = arith.constant 0 : index
    %c0_11 = arith.constant 0 : index
    %40 = vector.load %arg5[%c0_10, %c0_11] : memref<1x128xf32, #tpu.memory_space<vmem>>, vector<1x128xf32>
    tpu.vector_store %arg5[%c0_10, %c0_11], %39 {strides = array<i32>} : memref<1x128xf32, #tpu.memory_space<vmem>>, vector<1x128xf32>,
    return
  }
  func.func @transform_0(%arg0: i32, %arg1: i32) -> (i32, i32) {
    %c1_i32 = arith.constant 1 : i32
    %0 = arith.muli %arg0, %c1_i32 : i32
    %1 = arith.addi %0, %arg1 : i32
    %c0_i32 = arith.constant 0 : i32
    %c0_i32_0 = arith.constant 0 : i32
    return %c0_i32, %1 : i32, i32
  }
  func.func @transform_1(%arg0: i32, %arg1: i32) -> (i32, i32) {
    %c1_i32 = arith.constant 1 : i32
    %0 = arith.muli %arg0, %c1_i32 : i32
    %1 = arith.addi %0, %arg1 : i32
    %c0_i32 = arith.constant 0 : i32
    %c0_i32_0 = arith.constant 0 : i32
    return %c0_i32, %1 : i32, i32
  }
  func.func @transform_2(%arg0: i32, %arg1: i32) -> (i32, i32) {
    %c1_i32 = arith.constant 1 : i32
    %0 = arith.muli %arg0, %c1_i32 : i32
    %1 = arith.addi %0, %arg1 : i32
    %c0_i32 = arith.constant 0 : i32
    %c0_i32_0 = arith.constant 0 : i32
    return %c0_i32, %1 : i32, i32
  }
  func.func @transform_3(%arg0: i32, %arg1: i32) -> (i32, i32) {
    %c0_i32 = arith.constant 0 : i32
    %c0_i32_0 = arith.constant 0 : i32
    return %c0_i32, %arg0 : i32, i32
  }
}

</mosaic_0001>

<llo_original>
// kernel: tpu_custom_call.1
$region0: #{tpu_custom_call.1}
  #allocation0 [shape = 'u32[]', space=smem, size = 0x4, offset = 0x4, fixed_abs, tag = 'smem constant byte address 0x4 - core index']
  #allocation1 [shape = 'u32[144,128]{1,0:T(1,128)}', space=vmem, size = 0x12000, scoped, tag = 'internal scratch']
  %s0 = inlined_call_operand.hbm [shape: f32[2,256], index: 0, kind: input, shape index: {}]
  %s1 = inlined_call_operand.hbm [shape: f32[2,256], index: 1, kind: input, shape index: {}]
  %s2 = inlined_call_operand.vmem [shape: f32[1,256], index: 2, kind: input, shape index: {}]
  %s3 = inlined_call_operand.hbm [shape: f32[1,256], index: 3, kind: output, shape index: {}]
  %s4 = sld [smem:[#allocation0]]
  $region57: #{tpu_custom_call.1} parent=0
    _
  %s6 = ssub.s32 1, %s4
  %s7 = scalar_select 0, %s6, %s4
  $region1: #{tpu_custom_call.1} parent=0
    #allocation2 [shape = 'u8[2048]{0}', space=vmem, size = 0x800, scoped, tag = 'input window, operand 0']
    #allocation3 [shape = 's32[2]{0}', space=sflag, size = 0x8, scoped, tag = 'scoped memory for tpu_custom_call.1']
    #allocation4 [shape = 's32[2]{0}', space=sflag, size = 0x8, scoped, tag = 'scoped memory for tpu_custom_call.1']
    #allocation5 [shape = 'u8[2048]{0}', space=vmem, size = 0x800, scoped, tag = 'input window, operand 1']
    #allocation6 [shape = 's32[2]{0}', space=sflag, size = 0x8, scoped, tag = 'scoped memory for tpu_custom_call.1']
    #allocation7 [shape = 'u8[1024]{0}', space=vmem, size = 0x400, scoped, tag = 'output window, operand 0']
    %8 = vsyncpa [#allocation3], 0
    %s9 = scalar_lea.sflag [#allocation3], 1
    %10 = vsyncpa %s9, 0
    %11 = vsyncpa [#allocation6], 0
    %s12 = scalar_lea.sflag [#allocation6], 1
    %13 = vsyncpa %s12, 0
    %14 = vsyncpa [#allocation4], 0
    %s15 = scalar_lea.sflag [#allocation4], 1
    %16 = vsyncpa %s15, 0
    loop: start=0, step=1, limit=4
    $region2: #{tpu_custom_call.1} parent=1 // loop_pre_header
      _
    $region3: #{tpu_custom_call.1} parent=1 // loop_header
      %s18 = sphi 0, %s22
      %p19 = scmp.ge.s32.totalorder %s18, 4
      %s25 = sphi 0, %s37
      %s26 = sphi 0, %s33
      %s27 = sphi 0, %s25
      %s28 = sphi 0, %s26
      %s29 = sphi 0, %s27
      %s30 = sphi 0, %s28
      %s42 = sphi 0, %s44
      %s45 = sphi 0, %s42
      %s46 = sphi 0, %s45
      %s62 = sphi 0, %s46
      %s70 = sphi 0, %s72
      %s73 = sphi 0, %s70
      %s74 = sphi 0, %s73
      %s90 = sphi 0, %s74
      %s98 = sphi 0, %s100
      %s101 = sphi 0, %s98
      %s102 = sphi 0, %s101
      %s118 = sphi 0, %s102
      %s124 = sphi 0, %s126
      %s127 = sphi 0, %s124
      %s128 = sphi 0, %s127
      %s144 = sphi 0, %s128
    $region4: #{tpu_custom_call.1} parent=1 // loop_header_branch
      %21 = sbr.rel (%p19) target = $region8
    $region5: #{tpu_custom_call.1} parent=1 // loop_body
      %s23 = ssub.s32 %s18, 1
      %s24 = ssub.s32 %s18, 2
      %s31 = sadd.s32 1, %s26
      %p32 = scmp.ge.s32.totalorder %s31, 1
      %s33 = scalar_select %p32, 0, %s31
      %s34 = sadd.s32 1, %s25
      %s35 = scalar_select %p32, %s34, %s25
      %p36 = scmp.ge.s32.totalorder %s35, 2
      %s37 = scalar_select %p36, 0, %s35
      %s38 = sadd.s32 %s25, %s26
      %s39 = sadd.s32 %s37, %s33
      %s40 = ssub.s32 %s38, %s39
      %p41 = scmp.eq.s32.totalorder %s40, 0
      %s43 = sadd.s32 %s42, 1
      %s44 = scalar_select %p41, %s42, %s43
      %p47 = pneg %p41
      %p48 = scmp.eq.s32.totalorder %s18, 1
      %p49 = por %p47, %p48
      %p50 = scmp.ne.s32.totalorder %s42, %s45
      %p51 = scmp.eq.s32.totalorder %s18, 0
      %p52 = por %p50, %p51
      %p53 = scmp.ne.s32.totalorder %s42, %s45
      %p54 = scmp.eq.s32.totalorder %s23, 1
      %p55 = por %p53, %p54
      %p56 = scmp.ne.s32.totalorder %s45, %s46
      %p57 = scmp.eq.s32.totalorder %s23, 0
      %p58 = por %p56, %p57
      %p59 = scmp.ne.s32.totalorder %s45, %s46
      %p60 = scmp.eq.s32.totalorder %s24, 1
      %p61 = por %p59, %p60
      %p63 = scmp.ne.s32.totalorder %s46, %s62
      %p64 = scmp.eq.s32.totalorder %s24, 0
      %p65 = por %p63, %p64
      %s66 = sadd.s32 %s25, %s26
      %s67 = sadd.s32 %s37, %s33
      %s68 = ssub.s32 %s66, %s67
      %p69 = scmp.eq.s32.totalorder %s68, 0
      %s71 = sadd.s32 %s70, 1
      %s72 = scalar_select %p69, %s70, %s71
      %p75 = pneg %p69
      %p76 = scmp.eq.s32.totalorder %s18, 1
      %p77 = por %p75, %p76
      %p78 = scmp.ne.s32.totalorder %s70, %s73
      %p79 = scmp.eq.s32.totalorder %s18, 0
      %p80 = por %p78, %p79
      %p81 = scmp.ne.s32.totalorder %s70, %s73
      %p82 = scmp.eq.s32.totalorder %s23, 1
      %p83 = por %p81, %p82
      %p84 = scmp.ne.s32.totalorder %s73, %s74
      %p85 = scmp.eq.s32.totalorder %s23, 0
      %p86 = por %p84, %p85
      %p87 = scmp.ne.s32.totalorder %s73, %s74
      %p88 = scmp.eq.s32.totalorder %s24, 1
      %p89 = por %p87, %p88
      %p91 = scmp.ne.s32.totalorder %s74, %s90
      %p92 = scmp.eq.s32.totalorder %s24, 0
      %p93 = por %p91, %p92
      %s94 = sadd.s32 %s25, %s26
      %s95 = sadd.s32 %s37, %s33
      %s96 = ssub.s32 %s94, %s95
      %p97 = scmp.eq.s32.totalorder %s96, 0
      %s99 = sadd.s32 %s98, 1
      %s100 = scalar_select %p97, %s98, %s99
      %p103 = pneg %p97
      %p104 = scmp.eq.s32.totalorder %s18, 1
      %p105 = por %p103, %p104
      %p106 = scmp.ne.s32.totalorder %s98, %s101
      %p107 = scmp.eq.s32.totalorder %s18, 0
      %p108 = por %p106, %p107
      %p109 = scmp.ne.s32.totalorder %s98, %s101
      %p110 = scmp.eq.s32.totalorder %s23, 1
      %p111 = por %p109, %p110
      %p112 = scmp.ne.s32.totalorder %s101, %s102
      %p113 = scmp.eq.s32.totalorder %s23, 0
      %p114 = por %p112, %p113
      %p115 = scmp.ne.s32.totalorder %s101, %s102
      %p116 = scmp.eq.s32.totalorder %s24, 1
      %p117 = por %p115, %p116
      %p119 = scmp.ne.s32.totalorder %s102, %s118
      %p120 = scmp.eq.s32.totalorder %s24, 0
      %p121 = por %p119, %p120
      %s122 = ssub.s32 %s25, %s37
      %p123 = scmp.eq.s32.totalorder %s122, 0
      %s125 = sadd.s32 %s124, 1
      %s126 = scalar_select %p123, %s124, %s125
      %p129 = pneg %p123
      %p130 = scmp.eq.s32.totalorder %s18, 1
      %p131 = por %p129, %p130
      %p132 = scmp.ne.s32.totalorder %s124, %s127
      %p133 = scmp.eq.s32.totalorder %s18, 0
      %p134 = por %p132, %p133
      %p135 = scmp.ne.s32.totalorder %s124, %s127
      %p136 = scmp.eq.s32.totalorder %s23, 1
      %p137 = por %p135, %p136
      %p138 = scmp.ne.s32.totalorder %s127, %s128
      %p139 = scmp.eq.s32.totalorder %s23, 0
      %p140 = por %p138, %p139
      %p141 = scmp.ne.s32.totalorder %s127, %s128
      %p142 = scmp.eq.s32.totalorder %s24, 1
      %p143 = por %p141, %p142
      %p145 = scmp.ne.s32.totalorder %s128, %s144
      %p146 = scmp.eq.s32.totalorder %s24, 0
      %p147 = por %p145, %p146
      %p148 = scmp.le.s32.totalorder 1, %s18
      %p149 = scmp.lt.s32.totalorder %s18, 3
      %p150 = pnand %p148, %p149
      %p151 = pneg %p150
      // Predicated region
      $region9: #{tpu_custom_call.1} parent=5 // pred_check
        _
      $region10: #{tpu_custom_call.1} parent=5 // pred_check_branch
        %153 = sbr.rel (%p150) target = $region12
      $region11: #{tpu_custom_call.1} parent=5 // pred_region
        %s154 = ssub.s32 %s18, 1
      $region12: #{tpu_custom_call.1} parent=5 // pred_fallthru
        _
      %p155 = scmp.lt.s32.totalorder %s18, 2
      // Predicated region
      $region13: #{tpu_custom_call.1} parent=5 // pred_check
        %p156 = pneg %p155
      $region14: #{tpu_custom_call.1} parent=5 // pred_check_branch
        %158 = sbr.rel (%p156) target = $region16
      $region15: #{tpu_custom_call.1} parent=5 // pred_region
        // Predicated region
        $region17: #{tpu_custom_call.1} parent=15 // pred_check
          %p159 = pneg %p52
        $region18: #{tpu_custom_call.1} parent=15 // pred_check_branch
          %161 = sbr.rel (%p159) target = $region20
        $region19: #{tpu_custom_call.1} parent=15 // pred_region
          %s162 = sand.u32 %s42, 1
          %s163 = scalar_lea.sflag [#allocation3], %s162
          %s164 = sand.u32 %s42, 1
          %s165 = smul.addr %s164, 2
          %s166 = scalar_lea.vmem [#allocation2], %s165
          %s167 = sadd.s32 %s25, %s26
          %s169 = ssub.s32 32, 32
          %170 = vsyncadd %s163, %s169
          %s171 = smul.addr %s167, 32
          %s172 = scalar_lea.hbm %s0, %s171
          %s174 = sshll.u32 %s166, 4
          %s175 = int_to_ptr.vmem [resolvable:$true] %s174
          %177 = dma.hbm_to_vmem [thread:$0]  %s172, 32, %s175, %s163
        $region20: #{tpu_custom_call.1} parent=15 // pred_fallthru
          _
        // Predicated region
        $region21: #{tpu_custom_call.1} parent=15 // pred_check
          %p178 = pneg %p80
        $region22: #{tpu_custom_call.1} parent=15 // pred_check_branch
          %180 = sbr.rel (%p178) target = $region24
        $region23: #{tpu_custom_call.1} parent=15 // pred_region
          %s181 = sand.u32 %s70, 1
          %s182 = scalar_lea.sflag [#allocation6], %s181
          %s183 = sand.u32 %s70, 1
          %s184 = smul.addr %s183, 2
          %s185 = scalar_lea.vmem [#allocation5], %s184
          %s186 = sadd.s32 %s25, %s26
          %s188 = ssub.s32 32, 32
          %189 = vsyncadd %s182, %s188
          %s190 = smul.addr %s186, 32
          %s191 = scalar_lea.hbm %s1, %s190
          %s193 = sshll.u32 %s185, 4
          %s194 = int_to_ptr.vmem [resolvable:$true] %s193
          %196 = dma.hbm_to_vmem [thread:$0]  %s191, 32, %s194, %s182
        $region24: #{tpu_custom_call.1} parent=15 // pred_fallthru
          _
        // Predicated region
        $region25: #{tpu_custom_call.1} parent=15 // pred_check
          %p197 = pneg %p108
        $region26: #{tpu_custom_call.1} parent=15 // pred_check_branch
          %199 = sbr.rel (%p197) target = $region28
        $region27: #{tpu_custom_call.1} parent=15 // pred_region
          %s200 = sadd.s32 %s25, %s26
          %p201 = scmp.lt.s32.totalorder %s200, 1
          %s202 = scalar_select %p201, %s200, 1
          %s203 = scalar_lea.vmem %s2, %s202
          %s204 = sadd.s32 %s25, %s26
        $region28: #{tpu_custom_call.1} parent=15 // pred_fallthru
          _
      $region16: #{tpu_custom_call.1} parent=5 // pred_fallthru
        _
      %p205 = scmp.le.s32.totalorder 1, %s18
      %p206 = scmp.lt.s32.totalorder %s18, 3
      %p207 = pnand %p205, %p206
      %p208 = pneg %p207
      // Predicated region
      $region29: #{tpu_custom_call.1} parent=5 // pred_check
        _
      $region30: #{tpu_custom_call.1} parent=5 // pred_check_branch
        %210 = sbr.rel (%p207) target = $region32
      $region31: #{tpu_custom_call.1} parent=5 // pred_region
        %s211 = ssub.s32 %s18, 1
        %s212 = sand.u32 %s45, 1
        %s213 = scalar_lea.sflag [#allocation3], %s212
        %s214 = sand.u32 %s45, 1
        %s215 = smul.addr %s214, 2
        %s216 = scalar_lea.vmem [#allocation2], %s215
        // Predicated region
        $region33: #{tpu_custom_call.1} parent=31 // pred_check
          %p217 = pneg %p58
        $region34: #{tpu_custom_call.1} parent=31 // pred_check_branch
          %219 = sbr.rel (%p217) target = $region36
        $region35: #{tpu_custom_call.1} parent=31 // pred_region
          %220 = dma.done %s213, 32
        $region36: #{tpu_custom_call.1} parent=31 // pred_fallthru
          _
        %s221 = sand.u32 %s73, 1
        %s222 = scalar_lea.sflag [#allocation6], %s221
        %s223 = sand.u32 %s73, 1
        %s224 = smul.addr %s223, 2
        %s225 = scalar_lea.vmem [#allocation5], %s224
        // Predicated region
        $region37: #{tpu_custom_call.1} parent=31 // pred_check
          %p226 = pneg %p86
        $region38: #{tpu_custom_call.1} parent=31 // pred_check_branch
          %228 = sbr.rel (%p226) target = $region40
        $region39: #{tpu_custom_call.1} parent=31 // pred_region
          %229 = dma.done %s222, 32
        $region40: #{tpu_custom_call.1} parent=31 // pred_fallthru
          _
        %s230 = sand.u32 %s45, 1
        %s231 = scalar_lea.sflag [#allocation3], %s230
        %s232 = sand.u32 %s45, 1
        %s233 = smul.addr %s232, 2
        %s234 = scalar_lea.vmem [#allocation2], %s233
        %p235 = pneg %p58
        %p236 = pneg %p55
        %s237 = sand.u32 %s73, 1
        %s238 = scalar_lea.sflag [#allocation6], %s237
        %s239 = sand.u32 %s73, 1
        %s240 = smul.addr %s239, 2
        %s241 = scalar_lea.vmem [#allocation5], %s240
        %p242 = pneg %p86
        %p243 = pneg %p83
        %s244 = sadd.s32 %s27, %s28
        %p245 = scmp.lt.s32.totalorder %s244, 1
        %s246 = scalar_select %p245, %s244, 1
        %s247 = scalar_lea.vmem %s2, %s246
        %p248 = pneg %p114
        %p249 = pneg %p111
        %p250 = pneg %p140
        %p251 = pneg %p137
        %s252 = sand.u32 %s127, 1
        %s253 = scalar_lea.sflag [#allocation4], %s252
        %s254 = sand.u32 %s127, 1
        %s255 = scalar_lea.vmem [#allocation7], %s254
        %s256 = sadd.s32 %s27, %s28
        %s257 = sadd.s32 %s27, %s28
        %s258 = sadd.s32 %s27, %s28
        %p259 = scmp.lt.s32.totalorder %s258, 1
        %s260 = scalar_select %p259, %s258, 1
        %s261 = scalar_lea.vmem %s2, %s260
        %s262 = sadd.s32 %s27, %s28
        %p263 = scmp.eq.s32.totalorder %s28, 0
        // Predicated region
        $region41: #{tpu_custom_call.1} parent=31 // pred_check
          %p264 = pneg %p263
        $region42: #{tpu_custom_call.1} parent=31 // pred_check_branch
          %266 = sbr.rel (%p264) target = $region44
        $region43: #{tpu_custom_call.1} parent=31 // pred_region
          %267 = vst [vmem:[%s255] sm:$0x1] 0.0
        $region44: #{tpu_custom_call.1} parent=31 // pred_fallthru
          _
        %v268 = vld [vmem:[%s216] sm:$0x3]
        %v269 = vld [vmem:[%s225] sm:$0x3]
        %v270 = vmul.f32 %v268, %v269
        %v271 = vmul.f32 %v268, %v268
        %v272 = vmul.f32 %v269, %v269
        %v274 = vrot.slane %v270, 1
        %v276 = vadd.f32 %v270, %v274
        %v278 = vrot.slane %v271, 1
        %v280 = vadd.f32 %v271, %v278
        %v282 = vrot.slane %v272, 1
        %v284 = vadd.f32 %v272, %v282
        %v285 = vadd.f32 %v280, 1e-12
        %v286 = vrsqrt.pop %v285
        %v287 = vadd.f32 %v284, 1e-12
        %v288 = vrsqrt.pop %v287
        %v289 = vmul.f32 %v286, %v288
        %v290 = vmul.f32 %v276, %v289
        %v291 = vsub.f32 1.0, %v290
        %v292 = vld [vmem:[%s261] sm:$0x1]
        %v293 = vmul.f32 %v291, %v292
        %v294 = vld [vmem:[%s255] sm:$0x1]
        %v295 = vadd.f32 %v294, %v293
        %296 = vst [vmem:[%s255] sm:$0x1] %v295
        %s297 = sand.u32 %s127, 1
        %s298 = scalar_lea.sflag [#allocation4], %s297
        %s299 = sand.u32 %s127, 1
        %s300 = scalar_lea.vmem [#allocation7], %s299
        // Predicated region
        $region45: #{tpu_custom_call.1} parent=31 // pred_check
          %p301 = pneg %p137
        $region46: #{tpu_custom_call.1} parent=31 // pred_check_branch
          %303 = sbr.rel (%p301) target = $region48
        $region47: #{tpu_custom_call.1} parent=31 // pred_region
          %s305 = ssub.s32 16, 16
          %306 = vsyncadd %s298, %s305
          %s307 = smul.addr %s27, 16
          %s308 = scalar_lea.hbm %s3, %s307
          %s310 = sshll.u32 %s300, 4
          %s311 = int_to_ptr.vmem [resolvable:$true] %s310
          %313 = dma.vmem_to_hbm [thread:$0]  %s311, 16, %s308, %s298
        $region48: #{tpu_custom_call.1} parent=31 // pred_fallthru
          _
      $region32: #{tpu_custom_call.1} parent=5 // pred_fallthru
        _
      %p314 = scmp.le.s32.totalorder 2, %s18
      // Predicated region
      $region49: #{tpu_custom_call.1} parent=5 // pred_check
        %p315 = pneg %p314
      $region50: #{tpu_custom_call.1} parent=5 // pred_check_branch
        %317 = sbr.rel (%p315) target = $region52
      $region51: #{tpu_custom_call.1} parent=5 // pred_region
        %s318 = ssub.s32 %s18, 2
        // Predicated region
        $region53: #{tpu_custom_call.1} parent=51 // pred_check
          %p319 = pneg %p143
        $region54: #{tpu_custom_call.1} parent=51 // pred_check_branch
          %321 = sbr.rel (%p319) target = $region56
        $region55: #{tpu_custom_call.1} parent=51 // pred_region
          %s322 = sand.u32 %s128, 1
          %s323 = scalar_lea.sflag [#allocation4], %s322
          %s324 = sand.u32 %s128, 1
          %s325 = scalar_lea.vmem [#allocation7], %s324
          %326 = dma.done %s323, 16
        $region56: #{tpu_custom_call.1} parent=51 // pred_fallthru
          _
      $region52: #{tpu_custom_call.1} parent=5 // pred_fallthru
        _
    $region6: #{tpu_custom_call.1} parent=1 // loop_footer
      %s22 = sadd.s32 1, %s18
    $region7: #{tpu_custom_call.1} parent=1 // loop_footer_branch
      %17 = sbr.rel target = $region3
    $region8: #{tpu_custom_call.1} parent=1 // loop_exit
      _
    %327 = vsyncpa [#allocation3], 1
    %s328 = scalar_lea.sflag [#allocation3], 1
    %329 = vsyncpa %s328, 1
    %330 = vsyncpa [#allocation6], 1
    %s331 = scalar_lea.sflag [#allocation6], 1
    %332 = vsyncpa %s331, 1
    %333 = vsyncpa [#allocation4], 1
    %s334 = scalar_lea.sflag [#allocation4], 1
    %335 = vsyncpa %s334, 1

</llo_original>
